<compile_context>
chip_gen: v5e
topology: v5e:2x2
jax: 0.10.0
libtpu: 0.0.40
codegen_flags: <defaults>
</compile_context>

<pallas_src>
import functools

import jax
import jax.numpy as jnp
from jax.experimental import pallas as pl
from jax.experimental.pallas import tpu as pltpu

_HALO_LANES = 128      # halo side-array lane width: one full, unmasked lane tile
_DEEP_C_MAX = 128      # below this, stack taps into one deep MXU contraction
_FOLD_C_MAX = 32       # below this, fold batch elements into one grid step
_MAX_TILE_L = 4096     # absolute L-tile cap (further bounded by VMEM budget)


# --------------------------------------------------------------------------- #
# Kernel bodies
# --------------------------------------------------------------------------- #
def _resblock_body(x_ref, halo_ref, w_ref, b_ref, o_ref, *, tL, W, pad, nB, deep):
    # x_ref   : (nB, C, tL)          f32 raw input tile (also the residual branch)
    # halo_ref: (nB, C, 128) or None f32; cols [0,pad)=left halo, [pad,2*pad)=right
    #                                halo, rest zero.  Edge tiles carry zeros,
    #                                reproducing Conv1d 'same' zero padding.
    # w_ref   : (C, W*C)             conv weight, tap-major, pre-scaled by 0.3
    # b_ref   : (C, 1)               f32 bias, pre-scaled by 0.3
    # o_ref   : (nB, C, tL)
    b_col = b_ref[...]                                  # (C, 1) f32
    C = b_col.shape[0]
    conv_dtype = w_ref.dtype

    def padded_relu(b):
        x = x_ref[b]                                    # (C, tL) f32
        h = jnp.maximum(x, 0.0)                         # ReLU
        if pad > 0:
            halo_full = halo_ref[b]                     # (C, 128)
            halo = jnp.maximum(halo_full[:, :2 * pad], 0.0)   # ReLU(0)=0 keeps edges
            h = jnp.concatenate([halo[:, :pad], h, halo[:, pad:2 * pad]], axis=1)
        return x, h.astype(conv_dtype)                  # (C, tL + 2*pad)

    if deep:
        # Small C: stack the W shifted windows along the contraction axis and
        # lane-concatenate the folded batch elements -> ONE deep MXU matmul.
        xs, stacks = [], []
        for b in range(nB):
            x, hs = padded_relu(b)
            xs.append(x)
            stacks.append(jnp.concatenate([hs[:, k:k + tL] for k in range(W)], axis=0))
        h_all = stacks[0] if nB == 1 else jnp.concatenate(stacks, axis=1)  # (W*C, nB*tL)
        acc = jnp.dot(w_ref[...], h_all, preferred_element_type=jnp.float32)
        for b in range(nB):
            o_ref[b] = (xs[b] + acc[:, b * tL:(b + 1) * tL] + b_col).astype(o_ref.dtype)
    else:
        # Large C: the MXU contraction is already full, so do W accumulating
        # dots instead of materializing a (W*C, tL) stack (saves ~W x tile of
        # VMEM and W full-tile bf16 stores).
        # TODO(synk): the hs[:, k:k+tL] slices still re-lay-out across 128-lane
        # tiles; a pltpu.roll(h, +-k) + masked halo fix-up would move the shift
        # onto the XLU slot instead of copy chains.
        for b in range(nB):
            x, hs = padded_relu(b)
            acc = jnp.zeros((C, tL), jnp.float32)
            for k in range(W):
                acc = acc + jnp.dot(w_ref[:, k * C:(k + 1) * C], hs[:, k:k + tL],
                                    preferred_element_type=jnp.float32)
            o_ref[b] = (x + acc + b_col).astype(o_ref.dtype)


def _kernel_with_halo(x_ref, halo_ref, w_ref, b_ref, o_ref, *, tL, W, pad, nB, deep):
    _resblock_body(x_ref, halo_ref, w_ref, b_ref, o_ref,
                   tL=tL, W=W, pad=pad, nB=nB, deep=deep)


def _kernel_no_halo(x_ref, w_ref, b_ref, o_ref, *, tL, W, pad, nB, deep):
    _resblock_body(x_ref, None, w_ref, b_ref, o_ref,
                   tL=tL, W=W, pad=pad, nB=nB, deep=deep)


# --------------------------------------------------------------------------- #
# Host-side sizing helpers
# --------------------------------------------------------------------------- #
def _vmem_limit_bytes():
    """Per-generation scoped-VMEM limit: ~75% of physical, capped at 100 MiB."""
    cap = 64 * 1024 * 1024          # conservative fallback == v7x physical VMEM
    try:
        cap = int(pltpu.get_tpu_info().vmem_capacity_bytes)
    except Exception:
        pass
    return int(min(cap * 3 // 4, 100 * 1024 * 1024))


def _choose_n_block(N, C):
    """Fold batch elements into one grid step when C leaves sublanes starved."""
    if C > _FOLD_C_MAX:
        return 1
    for nb in range(min(N, 8), 0, -1):
        if N % nb == 0:
            return nb
    return 1


def _choose_tile_l(L, n_outer_steps, per_col_bytes, vmem_limit):
    """Pick the L tile size.  Returns (tile_l, padded_L)."""
    budget = vmem_limit // 2                           # headroom for double-buffering
    max_tl = min(_MAX_TILE_L, max(128, budget // max(per_col_bytes, 1)))
    max_tl -= max_tl % 128
    max_tl = max(max_tl, 128)
    if L <= max_tl:
        return L, L                                    # single full-dim tile is legal
    divisors = [t for t in range(128, max_tl + 1, 128) if L % t == 0]
    if divisors:
        # Largest tile that still leaves >= ~4 grid points (keeps both v7x
        # TensorCores and the pipeline busy); otherwise just the largest.
        good = [t for t in divisors if n_outer_steps * (L // t) >= 4]
        return (max(good) if good else max(divisors)), L
    # No 128-multiple divides L: pad L host-side up to a tile multiple (the
    # zero tail is sliced off the output) while bounding the relative waste.
    for t in range(max_tl, 127, -128):
        if (-L) % t <= max(128, L // 8):
            return t, L + ((-L) % t)
    return 128, L + ((-L) % 128)


# --------------------------------------------------------------------------- #
# Public wrapper
# --------------------------------------------------------------------------- #
def residual_block(x, weight, bias, *, tile_l=None, conv_dtype=jnp.bfloat16):
    """x: (N, C, L) f32; weight: (C, C, W) f32 (PyTorch OIW layout); bias: (C,)."""
    N, C, L = x.shape
    C_out, C_in, W = weight.shape
    assert C_out == C and C_in == C, "Conv1d must be channel-preserving"
    # Symmetric padding matches PyTorch/XLA 'same' only for odd filter widths.
    assert W % 2 == 1, "filter_width must be odd for symmetric 'same' padding"
    pad = (W - 1) // 2
    assert 2 * pad <= _HALO_LANES, "filter too wide for the 128-lane halo block"

    deep = C < _DEEP_C_MAX
    n_block = _choose_n_block(N, C)
    num_n = N // n_block

    vmem_limit = _vmem_limit_bytes()
    if tile_l is None:
        # Rough bytes per L-column per step: f32 in/out (double buffered) +
        # f32 acc + bf16 padded activations, plus the bf16 tap stack when deep.
        per_col = n_block * C * (24 + (2 * W if deep else 4))
        tile_l, L_pad = _choose_tile_l(L, num_n, per_col, vmem_limit)
    else:
        assert L % tile_l == 0, "explicit tile_l must divide L"
        L_pad = L

    x_p = x if L_pad == L else jnp.pad(x, ((0, 0), (0, 0), (0, L_pad - L)))
    num_l = L_pad // tile_l

    # --- tiny host-side parameter prep (O(W*C^2), done once) -----------------
    # weight (C_out, C_in, W) -> (C_out, W, C_in) -> (C_out, W*C_in); row k*C+ci
    # matches tap k / input channel ci.  The 0.3 residual scale is folded in.
    w_flat = jnp.transpose(weight, (0, 2, 1)).reshape(C, W * C)
    w_flat = (0.3 * w_flat).astype(conv_dtype)
    b_col = (0.3 * bias).reshape(C, 1).astype(jnp.float32)

    # --- halo columns: only the `pad` neighbour columns per L tile -----------
    # Last dim padded to 128 lanes so the per-step halo DMA is one unmasked
    # full-lane transfer; sequence edges carry zeros ('same' padding).
    operands = [x_p]
    in_specs = [pl.BlockSpec((n_block, C, tile_l), lambda n, l: (n, 0, l))]
    if pad > 0:
        if num_l > 1:
            xr = x_p.reshape(N, C, num_l, tile_l)
            zeros_edge = jnp.zeros((N, C, 1, pad), x.dtype)
            left = jnp.concatenate([zeros_edge, xr[:, :, :-1, tile_l - pad:]], axis=2)
            right = jnp.concatenate([xr[:, :, 1:, :pad], zeros_edge], axis=2)
            fill = jnp.zeros((N, C, num_l, _HALO_LANES - 2 * pad), x.dtype)
            halos = jnp.transpose(jnp.concatenate([left, right, fill], axis=3),
                                  (0, 2, 1, 3))                 # (N, num_l, C, 128)
        else:
            halos = jnp.zeros((N, 1, C, _HALO_LANES), x.dtype)
        operands.append(halos)
        in_specs.append(
            pl.BlockSpec((n_block, None, C, _HALO_LANES), lambda n, l: (n, l, 0, 0)))
        kernel_fn = _kernel_with_halo
    else:
        kernel_fn = _kernel_no_halo

    operands += [w_flat, b_col]
    in_specs += [pl.BlockSpec((C, W * C), lambda n, l: (0, 0)),
                 pl.BlockSpec((C, 1), lambda n, l: (0, 0))]

    kernel = functools.partial(kernel_fn, tL=tile_l, W=W, pad=pad,
                               nB=n_block, deep=deep)

    out = pl.pallas_call(
        kernel,
        out_shape=jax.ShapeDtypeStruct((N, C, L_pad), x.dtype),
        grid_spec=pltpu.PrefetchScalarGridSpec(
            num_scalar_prefetch=0,
            grid=(num_n, num_l),
            in_specs=in_specs,
            out_specs=pl.BlockSpec((n_block, C, tile_l), lambda n, l: (n, 0, l)),
        ),
        compiler_params=pltpu.CompilerParams(
            dimension_semantics=("parallel", "parallel"),
            vmem_limit_bytes=vmem_limit,
        ),
    )(*operands)
    return out if L_pad == L else out[:, :, :L]


# --------------------------------------------------------------------------- #
# Pure-JAX reference + self-test
# --------------------------------------------------------------------------- #
def _reference(x, weight, bias):
    # x + 0.3 * conv1d(relu(x)), 'same' padding, bias (all f32).
    h = jnp.maximum(x, 0.0)
    y = jax.lax.conv_general_dilated(
        h, weight, window_strides=(1,), padding="SAME",
        dimension_numbers=("NCH", "OIH", "NCH"))
    y = y + bias.reshape(1, -1, 1)
    return x + 0.3 * y


if __name__ == "__main__":
    key = jax.random.PRNGKey(0)
    k_x, k_w, k_b, k_x2, k_w2, k_b2, k_x3, k_w3, k_b3 = jax.random.split(key, 9)
    FW = 5

    # Test 1: module-like small shapes (single L tile, batch folding, deep path).
    N, C, L = 2, 4, 16
    x = jax.random.normal(k_x, (N, C, L), dtype=jnp.float32)
    weight = 0.1 * jax.random.normal(k_w, (C, C, FW), dtype=jnp.float32)
    bias = 0.1 * jax.random.normal(k_b, (C,), dtype=jnp.float32)
    out = jax.block_until_ready(residual_block(x, weight, bias))
    ref = _reference(x, weight, bias)
    assert out.shape == (N, C, L)
    assert jnp.allclose(out, ref, atol=2e-2, rtol=2e-2), "mismatch vs reference (test 1)"

    # Test 2: L tiling + cross-tile halos (deep path, folded batch).
    N2, C2, L2 = 2, 8, 256
    x2 = jax.random.normal(k_x2, (N2, C2, L2), dtype=jnp.float32)
    w2 = 0.1 * jax.random.normal(k_w2, (C2, C2, FW), dtype=jnp.float32)
    b2 = 0.1 * jax.random.normal(k_b2, (C2,), dtype=jnp.float32)
    out2 = jax.block_until_ready(residual_block(x2, w2, b2, tile_l=128))
    ref2 = _reference(x2, w2, b2)
    assert out2.shape == (N2, C2, L2)
    assert jnp.allclose(out2, ref2, atol=2e-2, rtol=2e-2), "mismatch vs reference (test 2)"

    # Test 3: large-C path (W accumulating dots, no tap stack) + cross-tile halos.
    N3, C3, L3 = 1, 128, 256
    x3 = jax.random.normal(k_x3, (N3, C3, L3), dtype=jnp.float32)
    w3 = 0.1 * jax.random.normal(k_w3, (C3, C3, FW), dtype=jnp.float32)
    b3 = 0.1 * jax.random.normal(k_b3, (C3,), dtype=jnp.float32)
    out3 = jax.block_until_ready(residual_block(x3, w3, b3, tile_l=128))
    ref3 = _reference(x3, w3, b3)
    assert out3.shape == (N3, C3, L3)
    assert jnp.allclose(out3, ref3, atol=2e-2, rtol=2e-2), "mismatch vs reference (test 3)"

    print("KERNEL_OK")
</pallas_src>

<mosaic_0001>
module attributes {stable_mosaic.version = 11 : i64} {
  func.func @_kernel_with_halo(%arg0: i32, %arg1: i32, %arg2: memref<2x4x16xf32, #tpu.memory_space<vmem>>, %arg3: memref<2x1x4x128xf32, #tpu.memory_space<vmem>>, %arg4: memref<4x20xbf16, #tpu.memory_space<vmem>>, %arg5: memref<4x1xf32, #tpu.memory_space<vmem>>, %arg6: memref<2x4x16xf32, #tpu.memory_space<vmem>>) attributes {dimension_semantics = [#tpu.dimension_semantics<parallel>, #tpu.dimension_semantics<parallel>], iteration_bounds = array<i64: 1, 1>, scalar_prefetch = 0 : i64, scratch_operands = 0 : i64, tpu.core_type = #tpu.core_type<tc>, window_params = [{transform_indices = @transform_0, window_bounds = array<i64: 2, 4, 16>}, {transform_indices = @transform_1, window_bounds = array<i64: 2, 1, 4, 128>}, {pipeline_mode = #tpu.pipeline_mode<synchronous>, transform_indices = @transform_2, window_bounds = array<i64: 4, 20>}, {pipeline_mode = #tpu.pipeline_mode<synchronous>, transform_indices = @transform_3, window_bounds = array<i64: 4, 1>}, {transform_indices = @transform_4, window_bounds = array<i64: 2, 4, 16>}]} {
    %c0 = arith.constant 0 : index
    %c0_0 = arith.constant 0 : index
    %0 = vector.load %arg5[%c0, %c0_0] : memref<4x1xf32, #tpu.memory_space<vmem>>, vector<4x1xf32>
    %c0_1 = arith.constant 0 : index
    %c0_2 = arith.constant 0 : index
    %c0_3 = arith.constant 0 : index
    %1 = vector.load %arg2[%c0_1, %c0_2, %c0_3] : memref<2x4x16xf32, #tpu.memory_space<vmem>>, vector<1x4x16xf32>
    %2 = vector.shape_cast %1 : vector<1x4x16xf32> to vector<4x16xf32>
    %cst = arith.constant 0.000000e+00 : f32
    %3 = vector.broadcast %cst : f32 to vector<4x16xf32>
    %4 = arith.maximumf %2, %3 : vector<4x16xf32>
    %c0_4 = arith.constant 0 : index
    %c0_5 = arith.constant 0 : index
    %c0_6 = arith.constant 0 : index
    %c0_7 = arith.constant 0 : index
    %5 = vector.load %arg3[%c0_4, %c0_5, %c0_6, %c0_7] : memref<2x1x4x128xf32, #tpu.memory_space<vmem>>, vector<1x1x4x128xf32>
    %6 = vector.shape_cast %5 : vector<1x1x4x128xf32> to vector<4x128xf32>
    %7 = vector.extract_strided_slice %6 {offsets = [0, 0], sizes = [4, 4], strides = [1, 1]} : vector<4x128xf32> to vector<4x4xf32>
    %cst_8 = arith.constant 0.000000e+00 : f32
    %8 = vector.broadcast %cst_8 : f32 to vector<4x4xf32>
    %9 = arith.maximumf %7, %8 : vector<4x4xf32>
    %10 = vector.extract_strided_slice %9 {offsets = [0, 0], sizes = [4, 2], strides = [1, 1]} : vector<4x4xf32> to vector<4x2xf32>
    %11 = vector.extract_strided_slice %9 {offsets = [0, 2], sizes = [4, 2], strides = [1, 1]} : vector<4x4xf32> to vector<4x2xf32>
    %12 = tpu.concatenate %10, %4, %11 in 1 : vector<4x2xf32>, vector<4x16xf32>, vector<4x2xf32> -> vector<4x20xf32>
    %13 = arith.truncf %12 : vector<4x20xf32> to vector<4x20xbf16>
    %14 = vector.extract_strided_slice %13 {offsets = [0, 0], sizes = [4, 16], strides = [1, 1]} : vector<4x20xbf16> to vector<4x16xbf16>
    %15 = vector.extract_strided_slice %13 {offsets = [0, 1], sizes = [4, 16], strides = [1, 1]} : vector<4x20xbf16> to vector<4x16xbf16>
    %16 = vector.extract_strided_slice %13 {offsets = [0, 2], sizes = [4, 16], strides = [1, 1]} : vector<4x20xbf16> to vector<4x16xbf16>
    %17 = vector.extract_strided_slice %13 {offsets = [0, 3], sizes = [4, 16], strides = [1, 1]} : vector<4x20xbf16> to vector<4x16xbf16>
    %18 = vector.extract_strided_slice %13 {offsets = [0, 4], sizes = [4, 16], strides = [1, 1]} : vector<4x20xbf16> to vector<4x16xbf16>
    %19 = tpu.concatenate %14, %15, %16, %17, %18 in 0 : vector<4x16xbf16>, vector<4x16xbf16>, vector<4x16xbf16>, vector<4x16xbf16>, vector<4x16xbf16> -> vector<20x16xbf16>
    %c1 = arith.constant 1 : index
    %c0_9 = arith.constant 0 : index
    %c0_10 = arith.constant 0 : index
    %20 = vector.load %arg2[%c1, %c0_9, %c0_10] : memref<2x4x16xf32, #tpu.memory_space<vmem>>, vector<1x4x16xf32>
    %21 = vector.shape_cast %20 : vector<1x4x16xf32> to vector<4x16xf32>
    %cst_11 = arith.constant 0.000000e+00 : f32
    %22 = vector.broadcast %cst_11 : f32 to vector<4x16xf32>
    %23 = arith.maximumf %21, %22 : vector<4x16xf32>
    %c1_12 = arith.constant 1 : index
    %c0_13 = arith.constant 0 : index
    %c0_14 = arith.constant 0 : index
    %c0_15 = arith.constant 0 : index
    %24 = vector.load %arg3[%c1_12, %c0_13, %c0_14, %c0_15] : memref<2x1x4x128xf32, #tpu.memory_space<vmem>>, vector<1x1x4x128xf32>
    %25 = vector.shape_cast %24 : vector<1x1x4x128xf32> to vector<4x128xf32>
    %26 = vector.extract_strided_slice %25 {offsets = [0, 0], sizes = [4, 4], strides = [1, 1]} : vector<4x128xf32> to vector<4x4xf32>
    %cst_16 = arith.constant 0.000000e+00 : f32
    %27 = vector.broadcast %cst_16 : f32 to vector<4x4xf32>
    %28 = arith.maximumf %26, %27 : vector<4x4xf32>
    %29 = vector.extract_strided_slice %28 {offsets = [0, 0], sizes = [4, 2], strides = [1, 1]} : vector<4x4xf32> to vector<4x2xf32>
    %30 = vector.extract_strided_slice %28 {offsets = [0, 2], sizes = [4, 2], strides = [1, 1]} : vector<4x4xf32> to vector<4x2xf32>
    %31 = tpu.concatenate %29, %23, %30 in 1 : vector<4x2xf32>, vector<4x16xf32>, vector<4x2xf32> -> vector<4x20xf32>
    %32 = arith.truncf %31 : vector<4x20xf32> to vector<4x20xbf16>
    %33 = vector.extract_strided_slice %32 {offsets = [0, 0], sizes = [4, 16], strides = [1, 1]} : vector<4x20xbf16> to vector<4x16xbf16>
    %34 = vector.extract_strided_slice %32 {offsets = [0, 1], sizes = [4, 16], strides = [1, 1]} : vector<4x20xbf16> to vector<4x16xbf16>
    %35 = vector.extract_strided_slice %32 {offsets = [0, 2], sizes = [4, 16], strides = [1, 1]} : vector<4x20xbf16> to vector<4x16xbf16>
    %36 = vector.extract_strided_slice %32 {offsets = [0, 3], sizes = [4, 16], strides = [1, 1]} : vector<4x20xbf16> to vector<4x16xbf16>
    %37 = vector.extract_strided_slice %32 {offsets = [0, 4], sizes = [4, 16], strides = [1, 1]} : vector<4x20xbf16> to vector<4x16xbf16>
    %38 = tpu.concatenate %33, %34, %35, %36, %37 in 0 : vector<4x16xbf16>, vector<4x16xbf16>, vector<4x16xbf16>, vector<4x16xbf16>, vector<4x16xbf16> -> vector<20x16xbf16>
    %39 = tpu.concatenate %19, %38 in 1 : vector<20x16xbf16>, vector<20x16xbf16> -> vector<20x32xbf16>
    %c0_17 = arith.constant 0 : index
    %c0_18 = arith.constant 0 : index
    %40 = vector.load %arg4[%c0_17, %c0_18] : memref<4x20xbf16, #tpu.memory_space<vmem>>, vector<4x20xbf16>
    %cst_19 = arith.constant dense<0.000000e+00> : vector<4x32xf32>
    %41 = tpu.matmul %40, %39, %cst_19 {dimension_numbers = #tpu.dot_dimension_numbers<[1], [0], [0], [1], [0, 0, 1, 1], [], []>} : vector<4x20xbf16>, vector<20x32xbf16>, vector<4x32xf32> -> vector<4x32xf32>
    %42 = vector.extract_strided_slice %41 {offsets = [0, 0], sizes = [4, 16], strides = [1, 1]} : vector<4x32xf32> to vector<4x16xf32>
    %43 = arith.addf %2, %42 : vector<4x16xf32>
    %44 = vector.broadcast %0 : vector<4x1xf32> to vector<4x16xf32>
    %45 = arith.addf %43, %44 : vector<4x16xf32>
    %c0_20 = arith.constant 0 : index
    %c0_21 = arith.constant 0 : index
    %c0_22 = arith.constant 0 : index
    %46 = vector.load %arg6[%c0_20, %c0_21, %c0_22] : memref<2x4x16xf32, #tpu.memory_space<vmem>>, vector<1x4x16xf32>
    %47 = vector.shape_cast %46 : vector<1x4x16xf32> to vector<4x16xf32>
    %48 = vector.shape_cast %45 : vector<4x16xf32> to vector<1x4x16xf32>
    tpu.vector_store %arg6[%c0_20, %c0_21, %c0_22], %48 {strides = array<i32>} : memref<2x4x16xf32, #tpu.memory_space<vmem>>, vector<1x4x16xf32>,
    %49 = vector.extract_strided_slice %41 {offsets = [0, 16], sizes = [4, 16], strides = [1, 1]} : vector<4x32xf32> to vector<4x16xf32>
    %50 = arith.addf %21, %49 : vector<4x16xf32>
    %51 = vector.broadcast %0 : vector<4x1xf32> to vector<4x16xf32>
    %52 = arith.addf %50, %51 : vector<4x16xf32>
    %c1_23 = arith.constant 1 : index
    %c0_24 = arith.constant 0 : index
    %c0_25 = arith.constant 0 : index
    %53 = vector.load %arg6[%c1_23, %c0_24, %c0_25] : memref<2x4x16xf32, #tpu.memory_space<vmem>>, vector<1x4x16xf32>
    %54 = vector.shape_cast %53 : vector<1x4x16xf32> to vector<4x16xf32>
    %55 = vector.shape_cast %52 : vector<4x16xf32> to vector<1x4x16xf32>
    tpu.vector_store %arg6[%c1_23, %c0_24, %c0_25], %55 {strides = array<i32>} : memref<2x4x16xf32, #tpu.memory_space<vmem>>, vector<1x4x16xf32>,
    return
  }
  func.func @transform_0(%arg0: i32, %arg1: i32) -> (i32, i32, i32) {
    %c0_i32 = arith.constant 0 : i32
    %c0_i32_0 = arith.constant 0 : i32
    return %arg0, %c0_i32, %arg1 : i32, i32, i32
  }
  func.func @transform_1(%arg0: i32, %arg1: i32) -> (i32, i32, i32, i32) {
    %c0_i32 = arith.constant 0 : i32
    %c0_i32_0 = arith.constant 0 : i32
    %c0_i32_1 = arith.constant 0 : i32
    return %arg0, %arg1, %c0_i32, %c0_i32_0 : i32, i32, i32, i32
  }
  func.func @transform_2(%arg0: i32, %arg1: i32) -> (i32, i32) {
    %c0_i32 = arith.constant 0 : i32
    %c0_i32_0 = arith.constant 0 : i32
    %c0_i32_1 = arith.constant 0 : i32
    return %c0_i32, %c0_i32_0 : i32, i32
  }
  func.func @transform_3(%arg0: i32, %arg1: i32) -> (i32, i32) {
    %c0_i32 = arith.constant 0 : i32
    %c0_i32_0 = arith.constant 0 : i32
    %c0_i32_1 = arith.constant 0 : i32
    return %c0_i32, %c0_i32_0 : i32, i32
  }
  func.func @transform_4(%arg0: i32, %arg1: i32) -> (i32, i32, i32) {
    %c0_i32 = arith.constant 0 : i32
    %c0_i32_0 = arith.constant 0 : i32
    return %arg0, %c0_i32, %arg1 : i32, i32, i32
  }
}

</mosaic_0001>

<llo_original>
// kernel: tpu_custom_call.1
$region0: #{tpu_custom_call.1}
  #allocation0 [shape = 'u32[]', space=smem, size = 0x4, offset = 0x4, fixed_abs, tag = 'smem constant byte address 0x4 - core index']
  #allocation1 [shape = 'u32[72,128]{1,0:T(1,128)}', space=vmem, size = 0x9000, scoped, tag = 'internal scratch']
  %s0 = inlined_call_operand.hbm [shape: f32[2,4,16], index: 0, kind: input, shape index: {}]
  %s1 = inlined_call_operand.hbm [shape: f32[2,1,4,128], index: 1, kind: input, shape index: {}]
  %s2 = inlined_call_operand.vmem [shape: bf16[4,20], index: 2, kind: input, shape index: {}]
  %s3 = inlined_call_operand.vmem [shape: f32[4,1], index: 3, kind: input, shape index: {}]
  %s4 = inlined_call_operand.hbm [shape: f32[2,4,16], index: 4, kind: output, shape index: {}]
  %s5 = sld [smem:[#allocation0]]
  $region34: #{tpu_custom_call.1} parent=0
    _
  %s7 = ssub.s32 1, %s5
  %s8 = scalar_select 0, %s7, %s5
  $region1: #{tpu_custom_call.1} parent=0
    #allocation2 [shape = 'u8[4096]{0}', space=vmem, size = 0x1000, scoped, tag = 'input window, operand 0, single buffered']
    #allocation3 [shape = 's32[1]{0}', space=sflag, size = 0x4, scoped, tag = 'scoped memory for tpu_custom_call.1']
    #allocation4 [shape = 's32[1]{0}', space=sflag, size = 0x4, scoped, tag = 'scoped memory for tpu_custom_call.1']
    #allocation5 [shape = 'u8[4096]{0}', space=vmem, size = 0x1000, scoped, tag = 'input window, operand 1, single buffered']
    #allocation6 [shape = 's32[1]{0}', space=sflag, size = 0x4, scoped, tag = 'scoped memory for tpu_custom_call.1']
    #allocation7 [shape = 'u8[4096]{0}', space=vmem, size = 0x1000, scoped, tag = 'output window, operand 0, single buffered']
    %9 = vsyncpa [#allocation3], 0
    %10 = vsyncpa [#allocation6], 0
    %11 = vsyncpa [#allocation4], 0
    // Predicated region
    $region2: #{tpu_custom_call.1} parent=1 // pred_check
      _
    $region3: #{tpu_custom_call.1} parent=1 // pred_check_branch
      %13 = sbr.rel (0) target = $region5
    $region4: #{tpu_custom_call.1} parent=1 // pred_region
      %15 = vsyncadd [#allocation3], 0
      %s16 = sshll.u32 %s0, 4
      %s17 = int_to_ptr.hbm [resolvable:$true] %s16
      %s18 = sshll.u32 [#allocation2], 4
      %s19 = int_to_ptr.vmem [resolvable:$true] %s18
      %24 = dma.hbm_to_vmem [thread:$0]  %s17, 128, %s19, [#allocation3], 64, 64, 4
    $region5: #{tpu_custom_call.1} parent=1 // pred_fallthru
      _
    // Predicated region
    $region6: #{tpu_custom_call.1} parent=1 // pred_check
      _
    $region7: #{tpu_custom_call.1} parent=1 // pred_check_branch
      %26 = sbr.rel (0) target = $region9
    $region8: #{tpu_custom_call.1} parent=1 // pred_region
      %28 = vsyncadd [#allocation6], 0
      %s29 = sshll.u32 %s1, 4
      %s30 = int_to_ptr.hbm [resolvable:$true] %s29
      %s31 = sshll.u32 [#allocation5], 4
      %s32 = int_to_ptr.vmem [resolvable:$true] %s31
      %37 = dma.hbm_to_vmem [thread:$0]  %s30, 128, %s32, [#allocation6], 64, 64, 4
    $region9: #{tpu_custom_call.1} parent=1 // pred_fallthru
      _
    // Predicated region
    $region10: #{tpu_custom_call.1} parent=1 // pred_check
      _
    $region11: #{tpu_custom_call.1} parent=1 // pred_check_branch
      %39 = sbr.rel (0) target = $region13
    $region12: #{tpu_custom_call.1} parent=1 // pred_region
      _
    $region13: #{tpu_custom_call.1} parent=1 // pred_fallthru
      _
    // Predicated region
    $region14: #{tpu_custom_call.1} parent=1 // pred_check
      _
    $region15: #{tpu_custom_call.1} parent=1 // pred_check_branch
      %41 = sbr.rel (0) target = $region17
    $region16: #{tpu_custom_call.1} parent=1 // pred_region
      _
    $region17: #{tpu_custom_call.1} parent=1 // pred_fallthru
      _
    // Predicated region
    $region18: #{tpu_custom_call.1} parent=1 // pred_check
      _
    $region19: #{tpu_custom_call.1} parent=1 // pred_check_branch
      %43 = sbr.rel (0) target = $region21
    $region20: #{tpu_custom_call.1} parent=1 // pred_region
      %45 = dma.done [#allocation3], 128
    $region21: #{tpu_custom_call.1} parent=1 // pred_fallthru
      _
    // Predicated region
    $region22: #{tpu_custom_call.1} parent=1 // pred_check
      _
    $region23: #{tpu_custom_call.1} parent=1 // pred_check_branch
      %47 = sbr.rel (0) target = $region25
    $region24: #{tpu_custom_call.1} parent=1 // pred_region
      %49 = dma.done [#allocation6], 128
    $region25: #{tpu_custom_call.1} parent=1 // pred_fallthru
      _
    %v51 = vld [vmem:[%s3] sm:$0xf]
    %v52 = vld [vmem:[#allocation2] sm:$0xf]
    %v53 = vmax.f32 %v52, 0.0
    %v54 = vld [vmem:[#allocation5] sm:$0xf]
    %v55 = vmax.f32 %v54, 0.0
    %57 = vrot.lane.b32.xlu0 %v53, 2
    %v58 = vpop.permute.xlu0 %57
    %61 = vrot.lane.b32.xlu0 %v55, 16
    %v62 = vpop.permute.xlu0 %61
    %vm64 = vcmask 15360
    %v65 = vsel %vm64, %v55, %v58
    %vm66 = vcmask 146432
    %v67 = vsel %vm66, %v65, %v62
    %v68 = vpack.c.bf16 %v67, %v67
    %v70 = vunpack.c.l.b16 %v68
    %v71 = vpack.c.b16 %v70, %v70
    %v72 = vrot.slane %v71, 6
    %73 = vrot.lane.b32.xlu0 %v72, 127
    %v74 = vpop.permute.xlu0 %73
    %75 = vrot.lane.b32.xlu0 %v71, 126
    %v76 = vpop.permute.xlu0 %75
    %v77 = vrot.slane %v71, 2
    %78 = vrot.lane.b32.xlu0 %v77, 125
    %v79 = vpop.permute.xlu0 %78
    %80 = vrot.lane.b32.xlu0 %v71, 124
    %v81 = vpop.permute.xlu0 %80
    %vm82 = vcmask 1041408
    %v85 = vsel %vm82, %v68, %v74
    %vm86 = vcmask 1043456
    %v88 = vsel %vm86, %v85, %v76
    %vm89 = vcmask 1045504
    %v91 = vsel %vm89, %v88, %v79
    %s92 = scalar_lea.vmem [#allocation2], 4
    %v93 = vld [vmem:[%s92] sm:$0xf]
    %v94 = vmax.f32 %v93, 0.0
    %s95 = scalar_lea.vmem [#allocation5], 4
    %v96 = vld [vmem:[%s95] sm:$0xf]
    %v97 = vmax.f32 %v96, 0.0
    %99 = vrot.lane.b32.xlu0 %v94, 2
    %v100 = vpop.permute.xlu0 %99
    %103 = vrot.lane.b32.xlu0 %v97, 16
    %v104 = vpop.permute.xlu0 %103
    %v106 = vsel %vm64, %v97, %v100
    %v107 = vsel %vm66, %v106, %v104
    %v108 = vpack.c.bf16 %v107, %v107
    %v110 = vunpack.c.l.b16 %v108
    %v111 = vpack.c.b16 %v110, %v110
    %v112 = vrot.slane %v111, 6
    %113 = vrot.lane.b32.xlu0 %v112, 127
    %v114 = vpop.permute.xlu0 %113
    %115 = vrot.lane.b32.xlu0 %v111, 126
    %v116 = vpop.permute.xlu0 %115
    %v117 = vrot.slane %v111, 2
    %118 = vrot.lane.b32.xlu0 %v117, 125
    %v119 = vpop.permute.xlu0 %118
    %120 = vrot.lane.b32.xlu0 %v111, 124
    %v121 = vpop.permute.xlu0 %120
    %v124 = vsel %vm82, %v108, %v114
    %v126 = vsel %vm86, %v124, %v116
    %v128 = vsel %vm89, %v126, %v119
    %130 = vrot.lane.b32.xlu0 %v128, 16
    %v131 = vpop.permute.xlu0 %130
    %132 = vrot.lane.b32.xlu0 %v121, 16
    %v133 = vpop.permute.xlu0 %132
    %vm134 = vcmask 130048
    %v136 = vsel %vm134, %v91, %v131
    %v140 = vsel %vm134, %v81, %v133
    %v141 = vld [vmem:[%s2] sm:$0x3]
    %vm142 = vcmask 162816
    %v144 = vsel %vm142, %v141, 0
    %v146 = vsel %vm82, %v140, 0
    %148 = vmatpush.bf16.msra.mxu0 0
    %149 = vmatpush.bf16.msra.mxu0 0
    %150 = vmatpush.bf16.msra.mxu0 0
    %151 = vmatpush.bf16.msra.mxu0 0
    %152 = vmatpush.bf16.msra.mxu0 0
    %153 = vmatpush.bf16.msra.mxu0 0
    %154 = vmatpush.bf16.msra.mxu0 %v146
    %155 = vmatpush.bf16.msra.mxu0 %v136
    %156 = vmatmul.bf16.gmra.mxu0 %v144
    %v157 = vpop.f32.mrf.mxu0
    %v158 = vadd.f32 0.0, %v157
    %v159 = vpop.f32.mrf.mxu0
    %160 = vdwg.mxu0
    %v161 = vadd.f32 %v52, %v158
    %163 = vset.pattern.permute.xlu0 0
    %164 = vperm.xlu0 %163, %v51
    %v165 = vpop.permute.xlu0 %164
    %v167 = vadd.f32 %v161, %v165
    %vm168 = vcmask 125952
    %169 = vst.msk [vmem:[#allocation7] sm:$0xf] %vm168, %v167
    %171 = vrot.lane.b32.xlu0 %v158, 112
    %v172 = vpop.permute.xlu0 %171
    %v174 = vadd.f32 %v93, %v172
    %v175 = vadd.f32 %v174, %v165
    %s176 = scalar_lea.vmem [#allocation7], 4
    %177 = vst.msk [vmem:[%s176] sm:$0xf] %vm168, %v175
    // Predicated region
    $region26: #{tpu_custom_call.1} parent=1 // pred_check
      _
    $region27: #{tpu_custom_call.1} parent=1 // pred_check_branch
      %179 = sbr.rel (0) target = $region29
    $region28: #{tpu_custom_call.1} parent=1 // pred_region
      %181 = vsyncadd [#allocation4], 0
      %s182 = sshll.u32 [#allocation7], 4
      %s183 = int_to_ptr.vmem [resolvable:$true] %s182
      %s184 = sshll.u32 %s4, 4
      %s185 = int_to_ptr.hbm [resolvable:$true] %s184
      %190 = dma.vmem_to_hbm [thread:$0]  %s183, 128, %s185, [#allocation4], 64, 64, 4
    $region29: #{tpu_custom_call.1} parent=1 // pred_fallthru
      _
    // Predicated region
    $region30: #{tpu_custom_call.1} parent=1 // pred_check
      _
    $region31: #{tpu_custom_call.1} parent=1 // pred_check_branch
      %192 = sbr.rel (0) target = $region33
    $region32: #{tpu_custom_call.1} parent=1 // pred_region
      %194 = dma.done [#allocation4], 128
    $region33: #{tpu_custom_call.1} parent=1 // pred_fallthru
      _
    %195 = vsyncpa [#allocation3], 1
    %196 = vsyncpa [#allocation6], 1
    %197 = vsyncpa [#allocation4], 1

</llo_original>
